<compile_context>
chip_gen: v7x
topology: tpu7x:2x2x1
jax: 0.10.0
libtpu: 0.0.40
codegen_flags: <defaults>
</compile_context>

<pallas_src>
import functools

import jax
import jax.numpy as jnp
from jax.experimental import pallas as pl
from jax.experimental.pallas import tpu as pltpu

_TILE_M = 512                      # M rows per grid step (on the lane axis)
_VMEM_LIMIT = 32 * 1024 * 1024     # safe on v5e/v6e (128 MiB) and v7x (64 MiB)


def _round_up(x, m):
    return (x + m - 1) // m * m


# ---------------------------------------------------------------------------
# Pallas kernel: one K-contraction tile + bias (+ fused skip-sum) (+ ReLU)
# ---------------------------------------------------------------------------
def _conv_kernel(*refs, apply_relu, num_extra):
    p_ref, w_ref, b_ref = refs[0], refs[1], refs[2]
    extra_refs = refs[3:3 + num_extra]
    o_ref = refs[3 + num_extra]

    # Single K = KH*KW*Cin contraction on the MXU (bf16 in, f32 accumulate).
    acc = jnp.dot(w_ref[...], p_ref[...], preferred_element_type=jnp.float32)
    acc = acc + b_ref[...]                      # bias broadcast over lanes
    for e_ref in extra_refs:                    # fused skip-sum epilogue (VPU)
        acc = acc + e_ref[...]
    if apply_relu:
        acc = jnp.maximum(acc, 0.0)
    o_ref[...] = acc.astype(o_ref.dtype)


# ---------------------------------------------------------------------------
# Conv wrapper (im2col glue in plain JAX, matmul in Pallas)
# ---------------------------------------------------------------------------
def conv2d_cfirst(a, w, b, *, pad=0, dilation=1, relu=False, extras=()):
    """3x3 (optionally dilated) conv, stride 1, channel-first activations.

    a:      (Cin, N, H, W) float32
    w:      (KH, KW, Cin, Cout)  HWIO
    b:      (Cout,)
    extras: optional tuple of (Cout, M_pad) float32 arrays added to the conv
            result before the (optional) ReLU  -> fused skip connection.
    Returns (spatial, flat):
            spatial = (Cout, N, OH, OW) float32
            flat    = (Cout, M_pad)     float32  (raw padded kernel output)
    """
    KH, KW, Cin, Cout = w.shape
    if pad:
        a = jnp.pad(a, ((0, 0), (0, 0), (pad, pad), (pad, pad)))
    _, N, H, W = a.shape
    OH = H - dilation * (KH - 1)
    OW = W - dilation * (KW - 1)
    M = N * OH * OW
    K = KH * KW * Cin

    # im2col in the transposed (K, M) layout: K on sublanes, M on lanes.
    # TODO(synk): this still re-materializes ~KH*KW x the activation through
    # HBM; an in-kernel halo scheme (load TILE rows + 2*dilation and slice the
    # 9 windows with pl.ds) would remove that amplification.
    taps = []
    for i in range(KH):
        for j in range(KW):
            win = a[:, :,
                    i * dilation:i * dilation + OH,
                    j * dilation:j * dilation + OW]
            taps.append(win.reshape(Cin, M))
    patches = jnp.concatenate(taps, axis=0)            # (K, M), k = t*Cin + c

    tile = min(_TILE_M, _round_up(M, 128))
    m_pad = _round_up(M, tile)
    k_pad = _round_up(K, 16)                           # bf16 sublane packing
    patches = jnp.pad(patches, ((0, k_pad - K), (0, m_pad - M)))
    patches = patches.astype(jnp.bfloat16)             # halve HBM traffic

    # w_mat[o, t*Cin + c] = w[i, j, c, o]
    w_mat = jnp.transpose(w, (3, 0, 1, 2)).reshape(Cout, K)
    w_mat = jnp.pad(w_mat, ((0, 0), (0, k_pad - K))).astype(jnp.bfloat16)
    b_col = b.reshape(Cout, 1).astype(jnp.float32)

    grid = (m_pad // tile,)
    in_specs = [
        pl.BlockSpec((k_pad, tile), lambda i: (0, i)),   # patches: stream M
        pl.BlockSpec((Cout, k_pad), lambda i: (0, 0)),   # weights: resident
        pl.BlockSpec((Cout, 1), lambda i: (0, 0)),       # bias:    resident
    ] + [pl.BlockSpec((Cout, tile), lambda i: (0, i)) for _ in extras]
    out_specs = pl.BlockSpec((Cout, tile), lambda i: (0, i))

    kern = functools.partial(_conv_kernel, apply_relu=relu,
                             num_extra=len(extras))
    flops = 2 * m_pad * k_pad * Cout
    bytes_accessed = (2 * (k_pad * m_pad + Cout * k_pad)          # bf16 inputs
                      + 4 * (Cout + (1 + len(extras)) * Cout * m_pad))

    out_flat = pl.pallas_call(
        kern,
        grid=grid,
        in_specs=in_specs,
        out_specs=out_specs,
        out_shape=jax.ShapeDtypeStruct((Cout, m_pad), jnp.float32),
        compiler_params=pltpu.CompilerParams(
            dimension_semantics=("parallel",),
            vmem_limit_bytes=_VMEM_LIMIT),
        cost_estimate=pl.CostEstimate(
            flops=flops, transcendentals=0, bytes_accessed=bytes_accessed),
    )(patches, w_mat, b_col, *extras)

    spatial = out_flat[:, :M].reshape(Cout, N, OH, OW)
    return spatial, out_flat


# ---------------------------------------------------------------------------
# DilateCenter parameters (deterministic, PyTorch Conv2d-style uniform init)
# ---------------------------------------------------------------------------
def init_dilate_center_params(key, in_size, out_size, ksize=3):
    def conv_params(k, cin, cout):
        kw, kb = jax.random.split(k)
        fan_in = cin * ksize * ksize
        bound = 1.0 / float(fan_in) ** 0.5
        w = jax.random.uniform(kw, (ksize, ksize, cin, cout), jnp.float32,
                               -bound, bound)
        b = jax.random.uniform(kb, (cout,), jnp.float32, -bound, bound)
        return w, b

    names = ["init", "d1", "d2", "d3", "d4", "end"]
    keys = jax.random.split(key, len(names))
    params = {}
    for n, k in zip(names, keys):
        cin = in_size if n == "init" else out_size
        w, b = conv_params(k, cin, out_size)
        params[f"w_{n}"] = w
        params[f"b_{n}"] = b
    return params


# ---------------------------------------------------------------------------
# DilateCenter forward (Pallas)
# ---------------------------------------------------------------------------
def dilate_center_forward(x_nchw, params):
    a = jnp.transpose(x_nchw, (1, 0, 2, 3))          # NCHW -> (C, N, H, W)
    x1, x1f = conv2d_cfirst(a, params["w_init"], params["b_init"],
                            pad=0, dilation=1, relu=True)
    x2, x2f = conv2d_cfirst(x1, params["w_d1"], params["b_d1"],
                            pad=1, dilation=1)
    x3, x3f = conv2d_cfirst(x2, params["w_d2"], params["b_d2"],
                            pad=2, dilation=2)
    x4, x4f = conv2d_cfirst(x3, params["w_d3"], params["b_d3"],
                            pad=3, dilation=3)
    # conv_d4 with fused epilogue: x6 = ReLU(x1 + x2 + x3 + x4 + conv_d4(x4))
    x6, _ = conv2d_cfirst(x4, params["w_d4"], params["b_d4"],
                          pad=4, dilation=4, relu=True,
                          extras=(x1f, x2f, x3f, x4f))
    y, _ = conv2d_cfirst(x6, params["w_end"], params["b_end"],
                         pad=0, dilation=1, relu=True)
    return jnp.transpose(y, (1, 0, 2, 3))            # (C, N, H, W) -> NCHW


# ---------------------------------------------------------------------------
# Pure-JAX reference (ground truth, full f32 precision)
# ---------------------------------------------------------------------------
def _conv_ref(x, w, b, pad, dilation, relu):
    y = jax.lax.conv_general_dilated(
        x, w, window_strides=(1, 1),
        padding=[(pad, pad), (pad, pad)],
        rhs_dilation=(dilation, dilation),
        dimension_numbers=("NHWC", "HWIO", "NHWC"),
        precision=jax.lax.Precision.HIGHEST)
    y = y + b
    return jnp.maximum(y, 0.0) if relu else y


def dilate_center_ref(x_nchw, params):
    x = jnp.transpose(x_nchw, (0, 2, 3, 1))
    x1 = _conv_ref(x,  params["w_init"], params["b_init"], 0, 1, True)
    x2 = _conv_ref(x1, params["w_d1"], params["b_d1"], 1, 1, False)
    x3 = _conv_ref(x2, params["w_d2"], params["b_d2"], 2, 2, False)
    x4 = _conv_ref(x3, params["w_d3"], params["b_d3"], 3, 3, False)
    x5 = _conv_ref(x4, params["w_d4"], params["b_d4"], 4, 4, False)
    x6 = jnp.maximum(x1 + x2 + x3 + x4 + x5, 0.0)
    y = _conv_ref(x6, params["w_end"], params["b_end"], 0, 1, True)
    return jnp.transpose(y, (0, 3, 1, 2))


# ---------------------------------------------------------------------------
if __name__ == "__main__":
    in_size, out_size = 4, 8
    key = jax.random.PRNGKey(0)
    kx, kp = jax.random.split(key)

    x = jax.random.normal(kx, (2, in_size, 16, 16), jnp.float32)  # NCHW
    params = init_dilate_center_params(kp, in_size, out_size)

    fwd = jax.jit(dilate_center_forward)
    y = fwd(x, params)
    jax.block_until_ready(y)

    assert y.shape == (2, out_size, 12, 12), y.shape

    y_ref = dilate_center_ref(x, params)
    rel_err = jnp.linalg.norm(y - y_ref) / jnp.linalg.norm(y_ref)
    max_abs = jnp.max(jnp.abs(y - y_ref))
    # bf16 MXU passes (f32 accumulate) vs f32-HIGHEST reference.
    assert float(rel_err) < 2e-2 and float(max_abs) < 5e-2, (
        float(rel_err), float(max_abs))

    print("KERNEL_OK")
</pallas_src>

<mosaic_0001>
module attributes {stable_mosaic.version = 11 : i64} {
  func.func @_conv_kernel(%arg0: i32, %arg1: memref<48x512xbf16, #tpu.memory_space<vmem>>, %arg2: memref<8x48xbf16, #tpu.memory_space<vmem>>, %arg3: memref<8x1xf32, #tpu.memory_space<vmem>>, %arg4: memref<8x512xf32, #tpu.memory_space<vmem>>) attributes {dimension_semantics = [#tpu.dimension_semantics<parallel>], iteration_bounds = array<i64: 1>, scalar_prefetch = 0 : i64, scratch_operands = 0 : i64, tpu.core_type = #tpu.core_type<tc>, window_params = [{transform_indices = @transform_0, window_bounds = array<i64: 48, 512>}, {pipeline_mode = #tpu.pipeline_mode<synchronous>, transform_indices = @transform_1, window_bounds = array<i64: 8, 48>}, {pipeline_mode = #tpu.pipeline_mode<synchronous>, transform_indices = @transform_2, window_bounds = array<i64: 8, 1>}, {transform_indices = @transform_3, window_bounds = array<i64: 8, 512>}]} {
    %c0 = arith.constant 0 : index
    %c0_0 = arith.constant 0 : index
    %0 = vector.load %arg2[%c0, %c0_0] : memref<8x48xbf16, #tpu.memory_space<vmem>>, vector<8x48xbf16>
    %c0_1 = arith.constant 0 : index
    %c0_2 = arith.constant 0 : index
    %1 = vector.load %arg1[%c0_1, %c0_2] : memref<48x512xbf16, #tpu.memory_space<vmem>>, vector<48x512xbf16>
    %cst = arith.constant dense<0.000000e+00> : vector<8x512xf32>
    %2 = tpu.matmul %0, %1, %cst {dimension_numbers = #tpu.dot_dimension_numbers<[1], [0], [0], [1], [0, 0, 1, 1], [], []>} : vector<8x48xbf16>, vector<48x512xbf16>, vector<8x512xf32> -> vector<8x512xf32>
    %c0_3 = arith.constant 0 : index
    %c0_4 = arith.constant 0 : index
    %3 = vector.load %arg3[%c0_3, %c0_4] : memref<8x1xf32, #tpu.memory_space<vmem>>, vector<8x1xf32>
    %4 = vector.broadcast %3 : vector<8x1xf32> to vector<8x512xf32>
    %5 = arith.addf %2, %4 : vector<8x512xf32>
    %cst_5 = arith.constant 0.000000e+00 : f32
    %6 = vector.broadcast %cst_5 : f32 to vector<8x512xf32>
    %7 = arith.maximumf %5, %6 : vector<8x512xf32>
    %c0_6 = arith.constant 0 : index
    %c0_7 = arith.constant 0 : index
    %8 = vector.load %arg4[%c0_6, %c0_7] : memref<8x512xf32, #tpu.memory_space<vmem>>, vector<8x512xf32>
    tpu.vector_store %arg4[%c0_6, %c0_7], %7 {strides = array<i32>} : memref<8x512xf32, #tpu.memory_space<vmem>>, vector<8x512xf32>,
    return
  }
  func.func @transform_0(%arg0: i32) -> (i32, i32) {
    %c0_i32 = arith.constant 0 : i32
    %c0_i32_0 = arith.constant 0 : i32
    return %c0_i32, %arg0 : i32, i32
  }
  func.func @transform_1(%arg0: i32) -> (i32, i32) {
    %c0_i32 = arith.constant 0 : i32
    %c0_i32_0 = arith.constant 0 : i32
    %c0_i32_1 = arith.constant 0 : i32
    return %c0_i32, %c0_i32_0 : i32, i32
  }
  func.func @transform_2(%arg0: i32) -> (i32, i32) {
    %c0_i32 = arith.constant 0 : i32
    %c0_i32_0 = arith.constant 0 : i32
    %c0_i32_1 = arith.constant 0 : i32
    return %c0_i32, %c0_i32_0 : i32, i32
  }
  func.func @transform_3(%arg0: i32) -> (i32, i32) {
    %c0_i32 = arith.constant 0 : i32
    %c0_i32_0 = arith.constant 0 : i32
    return %c0_i32, %arg0 : i32, i32
  }
}

module attributes {stable_mosaic.version = 11 : i64} {
  func.func @_conv_kernel(%arg0: i32, %arg1: memref<80x512xbf16, #tpu.memory_space<vmem>>, %arg2: memref<8x80xbf16, #tpu.memory_space<vmem>>, %arg3: memref<8x1xf32, #tpu.memory_space<vmem>>, %arg4: memref<8x512xf32, #tpu.memory_space<vmem>>) attributes {dimension_semantics = [#tpu.dimension_semantics<parallel>], iteration_bounds = array<i64: 1>, scalar_prefetch = 0 : i64, scratch_operands = 0 : i64, tpu.core_type = #tpu.core_type<tc>, window_params = [{transform_indices = @transform_0, window_bounds = array<i64: 80, 512>}, {pipeline_mode = #tpu.pipeline_mode<synchronous>, transform_indices = @transform_1, window_bounds = array<i64: 8, 80>}, {pipeline_mode = #tpu.pipeline_mode<synchronous>, transform_indices = @transform_2, window_bounds = array<i64: 8, 1>}, {transform_indices = @transform_3, window_bounds = array<i64: 8, 512>}]} {
    %c0 = arith.constant 0 : index
    %c0_0 = arith.constant 0 : index
    %0 = vector.load %arg2[%c0, %c0_0] : memref<8x80xbf16, #tpu.memory_space<vmem>>, vector<8x80xbf16>
    %c0_1 = arith.constant 0 : index
    %c0_2 = arith.constant 0 : index
    %1 = vector.load %arg1[%c0_1, %c0_2] : memref<80x512xbf16, #tpu.memory_space<vmem>>, vector<80x512xbf16>
    %cst = arith.constant dense<0.000000e+00> : vector<8x512xf32>
    %2 = tpu.matmul %0, %1, %cst {dimension_numbers = #tpu.dot_dimension_numbers<[1], [0], [0], [1], [0, 0, 1, 1], [], []>} : vector<8x80xbf16>, vector<80x512xbf16>, vector<8x512xf32> -> vector<8x512xf32>
    %c0_3 = arith.constant 0 : index
    %c0_4 = arith.constant 0 : index
    %3 = vector.load %arg3[%c0_3, %c0_4] : memref<8x1xf32, #tpu.memory_space<vmem>>, vector<8x1xf32>
    %4 = vector.broadcast %3 : vector<8x1xf32> to vector<8x512xf32>
    %5 = arith.addf %2, %4 : vector<8x512xf32>
    %c0_5 = arith.constant 0 : index
    %c0_6 = arith.constant 0 : index
    %6 = vector.load %arg4[%c0_5, %c0_6] : memref<8x512xf32, #tpu.memory_space<vmem>>, vector<8x512xf32>
    tpu.vector_store %arg4[%c0_5, %c0_6], %5 {strides = array<i32>} : memref<8x512xf32, #tpu.memory_space<vmem>>, vector<8x512xf32>,
    return
  }
  func.func @transform_0(%arg0: i32) -> (i32, i32) {
    %c0_i32 = arith.constant 0 : i32
    %c0_i32_0 = arith.constant 0 : i32
    return %c0_i32, %arg0 : i32, i32
  }
  func.func @transform_1(%arg0: i32) -> (i32, i32) {
    %c0_i32 = arith.constant 0 : i32
    %c0_i32_0 = arith.constant 0 : i32
    %c0_i32_1 = arith.constant 0 : i32
    return %c0_i32, %c0_i32_0 : i32, i32
  }
  func.func @transform_2(%arg0: i32) -> (i32, i32) {
    %c0_i32 = arith.constant 0 : i32
    %c0_i32_0 = arith.constant 0 : i32
    %c0_i32_1 = arith.constant 0 : i32
    return %c0_i32, %c0_i32_0 : i32, i32
  }
  func.func @transform_3(%arg0: i32) -> (i32, i32) {
    %c0_i32 = arith.constant 0 : i32
    %c0_i32_0 = arith.constant 0 : i32
    return %c0_i32, %arg0 : i32, i32
  }
}

module attributes {stable_mosaic.version = 11 : i64} {
  func.func @_conv_kernel(%arg0: i32, %arg1: memref<80x512xbf16, #tpu.memory_space<vmem>>, %arg2: memref<8x80xbf16, #tpu.memory_space<vmem>>, %arg3: memref<8x1xf32, #tpu.memory_space<vmem>>, %arg4: memref<8x512xf32, #tpu.memory_space<vmem>>, %arg5: memref<8x512xf32, #tpu.memory_space<vmem>>, %arg6: memref<8x512xf32, #tpu.memory_space<vmem>>, %arg7: memref<8x512xf32, #tpu.memory_space<vmem>>, %arg8: memref<8x512xf32, #tpu.memory_space<vmem>>) attributes {dimension_semantics = [#tpu.dimension_semantics<parallel>], iteration_bounds = array<i64: 1>, scalar_prefetch = 0 : i64, scratch_operands = 0 : i64, tpu.core_type = #tpu.core_type<tc>, window_params = [{transform_indices = @transform_0, window_bounds = array<i64: 80, 512>}, {pipeline_mode = #tpu.pipeline_mode<synchronous>, transform_indices = @transform_1, window_bounds = array<i64: 8, 80>}, {pipeline_mode = #tpu.pipeline_mode<synchronous>, transform_indices = @transform_2, window_bounds = array<i64: 8, 1>}, {transform_indices = @transform_3, window_bounds = array<i64: 8, 512>}, {transform_indices = @transform_4, window_bounds = array<i64: 8, 512>}, {transform_indices = @transform_5, window_bounds = array<i64: 8, 512>}, {transform_indices = @transform_6, window_bounds = array<i64: 8, 512>}, {transform_indices = @transform_7, window_bounds = array<i64: 8, 512>}]} {
    %c0 = arith.constant 0 : index
    %c0_0 = arith.constant 0 : index
    %0 = vector.load %arg2[%c0, %c0_0] : memref<8x80xbf16, #tpu.memory_space<vmem>>, vector<8x80xbf16>
    %c0_1 = arith.constant 0 : index
    %c0_2 = arith.constant 0 : index
    %1 = vector.load %arg1[%c0_1, %c0_2] : memref<80x512xbf16, #tpu.memory_space<vmem>>, vector<80x512xbf16>
    %cst = arith.constant dense<0.000000e+00> : vector<8x512xf32>
    %2 = tpu.matmul %0, %1, %cst {dimension_numbers = #tpu.dot_dimension_numbers<[1], [0], [0], [1], [0, 0, 1, 1], [], []>} : vector<8x80xbf16>, vector<80x512xbf16>, vector<8x512xf32> -> vector<8x512xf32>
    %c0_3 = arith.constant 0 : index
    %c0_4 = arith.constant 0 : index
    %3 = vector.load %arg3[%c0_3, %c0_4] : memref<8x1xf32, #tpu.memory_space<vmem>>, vector<8x1xf32>
    %4 = vector.broadcast %3 : vector<8x1xf32> to vector<8x512xf32>
    %5 = arith.addf %2, %4 : vector<8x512xf32>
    %c0_5 = arith.constant 0 : index
    %c0_6 = arith.constant 0 : index
    %6 = vector.load %arg4[%c0_5, %c0_6] : memref<8x512xf32, #tpu.memory_space<vmem>>, vector<8x512xf32>
    %7 = arith.addf %5, %6 : vector<8x512xf32>
    %c0_7 = arith.constant 0 : index
    %c0_8 = arith.constant 0 : index
    %8 = vector.load %arg5[%c0_7, %c0_8] : memref<8x512xf32, #tpu.memory_space<vmem>>, vector<8x512xf32>
    %9 = arith.addf %7, %8 : vector<8x512xf32>
    %c0_9 = arith.constant 0 : index
    %c0_10 = arith.constant 0 : index
    %10 = vector.load %arg6[%c0_9, %c0_10] : memref<8x512xf32, #tpu.memory_space<vmem>>, vector<8x512xf32>
    %11 = arith.addf %9, %10 : vector<8x512xf32>
    %c0_11 = arith.constant 0 : index
    %c0_12 = arith.constant 0 : index
    %12 = vector.load %arg7[%c0_11, %c0_12] : memref<8x512xf32, #tpu.memory_space<vmem>>, vector<8x512xf32>
    %13 = arith.addf %11, %12 : vector<8x512xf32>
    %cst_13 = arith.constant 0.000000e+00 : f32
    %14 = vector.broadcast %cst_13 : f32 to vector<8x512xf32>
    %15 = arith.maximumf %13, %14 : vector<8x512xf32>
    %c0_14 = arith.constant 0 : index
    %c0_15 = arith.constant 0 : index
    %16 = vector.load %arg8[%c0_14, %c0_15] : memref<8x512xf32, #tpu.memory_space<vmem>>, vector<8x512xf32>
    tpu.vector_store %arg8[%c0_14, %c0_15], %15 {strides = array<i32>} : memref<8x512xf32, #tpu.memory_space<vmem>>, vector<8x512xf32>,
    return
  }
  func.func @transform_0(%arg0: i32) -> (i32, i32) {
    %c0_i32 = arith.constant 0 : i32
    %c0_i32_0 = arith.constant 0 : i32
    return %c0_i32, %arg0 : i32, i32
  }
  func.func @transform_1(%arg0: i32) -> (i32, i32) {
    %c0_i32 = arith.constant 0 : i32
    %c0_i32_0 = arith.constant 0 : i32
    %c0_i32_1 = arith.constant 0 : i32
    return %c0_i32, %c0_i32_0 : i32, i32
  }
  func.func @transform_2(%arg0: i32) -> (i32, i32) {
    %c0_i32 = arith.constant 0 : i32
    %c0_i32_0 = arith.constant 0 : i32
    %c0_i32_1 = arith.constant 0 : i32
    return %c0_i32, %c0_i32_0 : i32, i32
  }
  func.func @transform_3(%arg0: i32) -> (i32, i32) {
    %c0_i32 = arith.constant 0 : i32
    %c0_i32_0 = arith.constant 0 : i32
    return %c0_i32, %arg0 : i32, i32
  }
  func.func @transform_4(%arg0: i32) -> (i32, i32) {
    %c0_i32 = arith.constant 0 : i32
    %c0_i32_0 = arith.constant 0 : i32
    return %c0_i32, %arg0 : i32, i32
  }
  func.func @transform_5(%arg0: i32) -> (i32, i32) {
    %c0_i32 = arith.constant 0 : i32
    %c0_i32_0 = arith.constant 0 : i32
    return %c0_i32, %arg0 : i32, i32
  }
  func.func @transform_6(%arg0: i32) -> (i32, i32) {
    %c0_i32 = arith.constant 0 : i32
    %c0_i32_0 = arith.constant 0 : i32
    return %c0_i32, %arg0 : i32, i32
  }
  func.func @transform_7(%arg0: i32) -> (i32, i32) {
    %c0_i32 = arith.constant 0 : i32
    %c0_i32_0 = arith.constant 0 : i32
    return %c0_i32, %arg0 : i32, i32
  }
}

module attributes {stable_mosaic.version = 11 : i64} {
  func.func @_conv_kernel(%arg0: i32, %arg1: memref<80x384xbf16, #tpu.memory_space<vmem>>, %arg2: memref<8x80xbf16, #tpu.memory_space<vmem>>, %arg3: memref<8x1xf32, #tpu.memory_space<vmem>>, %arg4: memref<8x384xf32, #tpu.memory_space<vmem>>) attributes {dimension_semantics = [#tpu.dimension_semantics<parallel>], iteration_bounds = array<i64: 1>, scalar_prefetch = 0 : i64, scratch_operands = 0 : i64, tpu.core_type = #tpu.core_type<tc>, window_params = [{transform_indices = @transform_0, window_bounds = array<i64: 80, 384>}, {pipeline_mode = #tpu.pipeline_mode<synchronous>, transform_indices = @transform_1, window_bounds = array<i64: 8, 80>}, {pipeline_mode = #tpu.pipeline_mode<synchronous>, transform_indices = @transform_2, window_bounds = array<i64: 8, 1>}, {transform_indices = @transform_3, window_bounds = array<i64: 8, 384>}]} {
    %c0 = arith.constant 0 : index
    %c0_0 = arith.constant 0 : index
    %0 = vector.load %arg2[%c0, %c0_0] : memref<8x80xbf16, #tpu.memory_space<vmem>>, vector<8x80xbf16>
    %c0_1 = arith.constant 0 : index
    %c0_2 = arith.constant 0 : index
    %1 = vector.load %arg1[%c0_1, %c0_2] : memref<80x384xbf16, #tpu.memory_space<vmem>>, vector<80x384xbf16>
    %cst = arith.constant dense<0.000000e+00> : vector<8x384xf32>
    %2 = tpu.matmul %0, %1, %cst {dimension_numbers = #tpu.dot_dimension_numbers<[1], [0], [0], [1], [0, 0, 1, 1], [], []>} : vector<8x80xbf16>, vector<80x384xbf16>, vector<8x384xf32> -> vector<8x384xf32>
    %c0_3 = arith.constant 0 : index
    %c0_4 = arith.constant 0 : index
    %3 = vector.load %arg3[%c0_3, %c0_4] : memref<8x1xf32, #tpu.memory_space<vmem>>, vector<8x1xf32>
    %4 = vector.broadcast %3 : vector<8x1xf32> to vector<8x384xf32>
    %5 = arith.addf %2, %4 : vector<8x384xf32>
    %cst_5 = arith.constant 0.000000e+00 : f32
    %6 = vector.broadcast %cst_5 : f32 to vector<8x384xf32>
    %7 = arith.maximumf %5, %6 : vector<8x384xf32>
    %c0_6 = arith.constant 0 : index
    %c0_7 = arith.constant 0 : index
    %8 = vector.load %arg4[%c0_6, %c0_7] : memref<8x384xf32, #tpu.memory_space<vmem>>, vector<8x384xf32>
    tpu.vector_store %arg4[%c0_6, %c0_7], %7 {strides = array<i32>} : memref<8x384xf32, #tpu.memory_space<vmem>>, vector<8x384xf32>,
    return
  }
  func.func @transform_0(%arg0: i32) -> (i32, i32) {
    %c0_i32 = arith.constant 0 : i32
    %c0_i32_0 = arith.constant 0 : i32
    return %c0_i32, %arg0 : i32, i32
  }
  func.func @transform_1(%arg0: i32) -> (i32, i32) {
    %c0_i32 = arith.constant 0 : i32
    %c0_i32_0 = arith.constant 0 : i32
    %c0_i32_1 = arith.constant 0 : i32
    return %c0_i32, %c0_i32_0 : i32, i32
  }
  func.func @transform_2(%arg0: i32) -> (i32, i32) {
    %c0_i32 = arith.constant 0 : i32
    %c0_i32_0 = arith.constant 0 : i32
    %c0_i32_1 = arith.constant 0 : i32
    return %c0_i32, %c0_i32_0 : i32, i32
  }
  func.func @transform_3(%arg0: i32) -> (i32, i32) {
    %c0_i32 = arith.constant 0 : i32
    %c0_i32_0 = arith.constant 0 : i32
    return %c0_i32, %arg0 : i32, i32
  }
}

</mosaic_0001>

<llo_original>
// kernel: dilate_center_forward.6
$region0: #{dilate_center_forward.6}
  #allocation0 [shape = 'u32[]', space=smem, size = 0x4, offset = 0x4, fixed_abs, tag = 'smem constant byte address 0x4 - core index']
  #allocation1 [shape = 'u32[144,128]{1,0:T(1,128)}', space=vmem, size = 0x12000, scoped, tag = 'internal scratch']
  %s0 = inlined_call_operand.vmem [shape: bf16[48,512], index: 0, kind: input, shape index: {}]
  %s1 = inlined_call_operand.vmem [shape: bf16[8,48], index: 1, kind: input, shape index: {}]
  %s2 = inlined_call_operand.vmem [shape: f32[8,1], index: 2, kind: input, shape index: {}]
  %s3 = inlined_call_operand.vmem [shape: f32[8,512], index: 3, kind: output, shape index: {}]
  %s4 = sld [smem:[#allocation0]]
  $region22: #{dilate_center_forward.6} parent=0
    _
  %s6 = ssub.s32 1, %s4
  %s7 = scalar_select 0, %s6, %s4
  // Predicated region
  $region2: #{dilate_center_forward.6} parent=0 // pred_check
    _
  $region3: #{dilate_center_forward.6} parent=0 // pred_check_branch
    %9 = sbr.rel (0) target = $region5
  $region4: #{dilate_center_forward.6} parent=0 // pred_region
    _
  $region5: #{dilate_center_forward.6} parent=0 // pred_fallthru
    _
  // Predicated region
  $region6: #{dilate_center_forward.6} parent=0 // pred_check
    _
  $region7: #{dilate_center_forward.6} parent=0 // pred_check_branch
    %11 = sbr.rel (0) target = $region9
  $region8: #{dilate_center_forward.6} parent=0 // pred_region
    _
  $region9: #{dilate_center_forward.6} parent=0 // pred_fallthru
    _
  // Predicated region
  $region10: #{dilate_center_forward.6} parent=0 // pred_check
    _
  $region11: #{dilate_center_forward.6} parent=0 // pred_check_branch
    %13 = sbr.rel (0) target = $region13
  $region12: #{dilate_center_forward.6} parent=0 // pred_region
    _
  $region13: #{dilate_center_forward.6} parent=0 // pred_fallthru
    _
  %v15 = vld [vmem:[%s1] sm:$0xf]
  %v16 = vld [vmem:[%s0] sm:$0xff]
  %v17 = vld [vmem:[%s0 + $0x8] sm:$0xff]
  %v18 = vld [vmem:[%s0 + $0x10] sm:$0xff]
  %v19 = vld [vmem:[%s0 + $0x18] sm:$0xff]
  %v20 = vld [vmem:[%s0 + $0x20] sm:$0xff]
  %v21 = vld [vmem:[%s0 + $0x28] sm:$0xff]
  %v22 = vld [vmem:[%s0 + $0x30] sm:$0xff]
  %v23 = vld [vmem:[%s0 + $0x38] sm:$0xff]
  %v24 = vld [vmem:[%s0 + $0x40] sm:$0xff]
  %v25 = vld [vmem:[%s0 + $0x48] sm:$0xff]
  %v26 = vld [vmem:[%s0 + $0x50] sm:$0xff]
  %v27 = vld [vmem:[%s0 + $0x58] sm:$0xff]
  %v28 = vld [vmem:[%s2] sm:$0xff]
  %30 = vset.pattern.permute.xlu0 0
  %31 = vperm.xlu0 %30, %v28
  %v32 = vpop.permute.xlu0 %31
  %v46 = vunpack.c.l.b16 %v16
  %v47 = vunpack.c.h.b16 %v16
  %v48 = vunpack.c.l.b16 %v17
  %v49 = vunpack.c.h.b16 %v17
  %v50 = vunpack.c.l.b16 %v18
  %v51 = vunpack.c.h.b16 %v18
  %v52 = vunpack.c.l.b16 %v19
  %v53 = vunpack.c.h.b16 %v19
  %v54 = vunpack.c.l.b16 %v20
  %v55 = vunpack.c.h.b16 %v20
  %v56 = vunpack.c.l.b16 %v21
  %v57 = vunpack.c.h.b16 %v21
  %v58 = vunpack.c.l.b16 %v22
  %v59 = vunpack.c.h.b16 %v22
  %v60 = vunpack.c.l.b16 %v23
  %v61 = vunpack.c.h.b16 %v23
  %v62 = vunpack.c.l.b16 %v24
  %v63 = vunpack.c.h.b16 %v24
  %v64 = vunpack.c.l.b16 %v25
  %v65 = vunpack.c.h.b16 %v25
  %v66 = vunpack.c.l.b16 %v26
  %v67 = vunpack.c.h.b16 %v26
  %v68 = vunpack.c.l.b16 %v27
  %v69 = vunpack.c.h.b16 %v27
  %v70 = vpack.c.b16 %v50, %v46
  %v71 = vpack.c.b16 %v51, %v47
  %v72 = vpack.c.b16 %v52, %v48
  %v73 = vpack.c.b16 %v53, %v49
  %v74 = vpack.c.b16 %v58, %v54
  %v75 = vpack.c.b16 %v59, %v55
  %v76 = vpack.c.b16 %v60, %v56
  %v77 = vpack.c.b16 %v61, %v57
  %v78 = vpack.c.b16 %v66, %v62
  %v79 = vpack.c.b16 %v67, %v63
  %v80 = vpack.c.b16 %v68, %v64
  %v81 = vpack.c.b16 %v69, %v65
  %vm94 = vcmask 392192
  %v96 = vsel %vm94, %v15, 0
  %98 = vmatprep.subr.bf16.mxu0 %v71
  %99 = vmatpush1.bf16.msra.mxu0 %v70
  %100 = vmatprep.subr.bf16.mxu0 %v75
  %101 = vmatpush1.bf16.msra.mxu0 %v74
  %102 = vmatprep.subr.bf16.mxu0 %v79
  %103 = vmatpush1.bf16.msra.mxu0 %v78
  %104 = vmatprep.subr.bf16.mxu0 0
  %105 = vmatpush1.bf16.msra.mxu0 0
  %106 = vmatprep.subr.bf16.mxu0 0
  %107 = vmatpush1.bf16.msra.mxu0 0
  %108 = vmatprep.subr.bf16.mxu0 0
  %109 = vmatpush1.bf16.msra.mxu0 0
  %110 = vmatprep.subr.bf16.mxu0 0
  %111 = vmatpush1.bf16.msra.mxu0 0
  %112 = vmatprep.subr.bf16.mxu0 0
  %113 = vmatpush1.bf16.msra.mxu0 0
  %114 = vmatprep.subr.bf16.mxu0 0
  %115 = vmatpush1.bf16.msra.mxu0 0
  %116 = vmatprep.subr.bf16.mxu0 0
  %117 = vmatpush1.bf16.msra.mxu0 0
  %118 = vmatprep.subr.bf16.mxu0 0
  %119 = vmatpush1.bf16.msra.mxu0 0
  %120 = vmatprep.subr.bf16.mxu0 0
  %121 = vmatpush1.bf16.msra.mxu0 0
  %122 = vmatprep.subr.bf16.mxu0 0
  %123 = vmatpush1.bf16.msra.mxu0 0
  %124 = vmatprep.subr.bf16.mxu0 0
  %125 = vmatpush1.bf16.msra.mxu0 0
  %126 = vmatprep.subr.bf16.mxu0 0
  %127 = vmatpush1.bf16.msra.mxu0 0
  %128 = vmatprep.subr.bf16.mxu0 0
  %129 = vmatpush1.bf16.msra.mxu0 0
  %130 = vmatprep.mubr.bf16.mxu0 0
  %131 = vmatmul.mubr.bf16.gmra.mrb[0].mxu0 %v96
  %v132 = vpop.f32.mrb[0].mxu0
  %v133 = vadd.f32 %v32, %v132
  %v134 = vpop.f32.mrb[0].mxu0
  %v135 = vadd.f32 %v32, %v134
  %v136 = vpop.f32.mrb[0].mxu0
  %v137 = vpop.f32.mrb[0].mxu0
  %138 = vdwg.mxu0
  %139 = vmatprep.subr.bf16.mxu0 %v73
  %140 = vmatpush1.bf16.msra.mxu0 %v72
  %141 = vmatprep.subr.bf16.mxu0 %v77
  %142 = vmatpush1.bf16.msra.mxu0 %v76
  %143 = vmatprep.subr.bf16.mxu0 %v81
  %144 = vmatpush1.bf16.msra.mxu0 %v80
  %145 = vmatprep.subr.bf16.mxu0 0
  %146 = vmatpush1.bf16.msra.mxu0 0
  %147 = vmatprep.subr.bf16.mxu0 0
  %148 = vmatpush1.bf16.msra.mxu0 0
  %149 = vmatprep.subr.bf16.mxu0 0
  %150 = vmatpush1.bf16.msra.mxu0 0
  %151 = vmatprep.subr.bf16.mxu0 0
  %152 = vmatpush1.bf16.msra.mxu0 0
  %153 = vmatprep.subr.bf16.mxu0 0
  %154 = vmatpush1.bf16.msra.mxu0 0
  %155 = vmatprep.subr.bf16.mxu0 0
  %156 = vmatpush1.bf16.msra.mxu0 0
  %157 = vmatprep.subr.bf16.mxu0 0
  %158 = vmatpush1.bf16.msra.mxu0 0
  %159 = vmatprep.subr.bf16.mxu0 0
  %160 = vmatpush1.bf16.msra.mxu0 0
  %161 = vmatprep.subr.bf16.mxu0 0
  %162 = vmatpush1.bf16.msra.mxu0 0
  %163 = vmatprep.subr.bf16.mxu0 0
  %164 = vmatpush1.bf16.msra.mxu0 0
  %165 = vmatprep.subr.bf16.mxu0 0
  %166 = vmatpush1.bf16.msra.mxu0 0
  %167 = vmatprep.subr.bf16.mxu0 0
  %168 = vmatpush1.bf16.msra.mxu0 0
  %169 = vmatprep.subr.bf16.mxu0 0
  %170 = vmatpush1.bf16.msra.mxu0 0
  %171 = vmatprep.mubr.bf16.mxu0 0
  %172 = vmatmul.mubr.bf16.gmra.mrb[0].mxu0 %v96
  %v173 = vpop.f32.mrb[0].mxu0
  %v174 = vadd.f32 %v32, %v173
  %v175 = vpop.f32.mrb[0].mxu0
  %v176 = vadd.f32 %v32, %v175
  %v177 = vpop.f32.mrb[0].mxu0
  %v178 = vpop.f32.mrb[0].mxu0
  %179 = vdwg.mxu0
  %v180 = vmax.f32 %v133, 0.0
  %v181 = vmax.f32 %v135, 0.0
  %v182 = vmax.f32 %v174, 0.0
  %v183 = vmax.f32 %v176, 0.0
  %184 = vst [vmem:[%s3] sm:$0xff] %v180
  %185 = vst [vmem:[%s3 + $0x8] sm:$0xff] %v181
  %186 = vst [vmem:[%s3 + $0x10] sm:$0xff] %v182
  %187 = vst [vmem:[%s3 + $0x18] sm:$0xff] %v183
  // Predicated region
  $region14: #{dilate_center_forward.6} parent=0 // pred_check
    _
  $region15: #{dilate_center_forward.6} parent=0 // pred_check_branch
    %189 = sbr.rel (0) target = $region17
  $region16: #{dilate_center_forward.6} parent=0 // pred_region
    _
  $region17: #{dilate_center_forward.6} parent=0 // pred_fallthru
    _
  // Predicated region
  $region18: #{dilate_center_forward.6} parent=0 // pred_check
    _
  $region19: #{dilate_center_forward.6} parent=0 // pred_check_branch
    %191 = sbr.rel (0) target = $region21
  $region20: #{dilate_center_forward.6} parent=0 // pred_region
    _
  $region21: #{dilate_center_forward.6} parent=0 // pred_fallthru
    _

// kernel: dilate_center_forward.7
$region0: #{dilate_center_forward.7}
  #allocation0 [shape = 'u32[]', space=smem, size = 0x4, offset = 0x4, fixed_abs, tag = 'smem constant byte address 0x4 - core index']
  #allocation1 [shape = 'u32[144,128]{1,0:T(1,128)}', space=vmem, size = 0x12000, scoped, tag = 'internal scratch']
  %s0 = inlined_call_operand.vmem [shape: bf16[80,512], index: 0, kind: input, shape index: {}]
  %s1 = inlined_call_operand.vmem [shape: bf16[8,80], index: 1, kind: input, shape index: {}]
  %s2 = inlined_call_operand.vmem [shape: f32[8,1], index: 2, kind: input, shape index: {}]
  %s3 = inlined_call_operand.vmem [shape: f32[8,512], index: 3, kind: output, shape index: {}]
  %s4 = sld [smem:[#allocation0]]
  $region22: #{dilate_center_forward.7} parent=0
    _
  %s6 = ssub.s32 1, %s4
  %s7 = scalar_select 0, %s6, %s4
  // Predicated region
  $region2: #{dilate_center_forward.7} parent=0 // pred_check
    _
  $region3: #{dilate_center_forward.7} parent=0 // pred_check_branch
    %9 = sbr.rel (0) target = $region5
  $region4: #{dilate_center_forward.7} parent=0 // pred_region
    _
  $region5: #{dilate_center_forward.7} parent=0 // pred_fallthru
    _
  // Predicated region
  $region6: #{dilate_center_forward.7} parent=0 // pred_check
    _
  $region7: #{dilate_center_forward.7} parent=0 // pred_check_branch
    %11 = sbr.rel (0) target = $region9
  $region8: #{dilate_center_forward.7} parent=0 // pred_region
    _
  $region9: #{dilate_center_forward.7} parent=0 // pred_fallthru
    _
  // Predicated region
  $region10: #{dilate_center_forward.7} parent=0 // pred_check
    _
  $region11: #{dilate_center_forward.7} parent=0 // pred_check_branch
    %13 = sbr.rel (0) target = $region13
  $region12: #{dilate_center_forward.7} parent=0 // pred_region
    _
  $region13: #{dilate_center_forward.7} parent=0 // pred_fallthru
    _
  %v15 = vld [vmem:[%s1] sm:$0xf]
  %v16 = vld [vmem:[%s0] sm:$0xff]
  %v17 = vld [vmem:[%s0 + $0x8] sm:$0xff]
  %v18 = vld [vmem:[%s0 + $0x10] sm:$0xff]
  %v19 = vld [vmem:[%s0 + $0x18] sm:$0xff]
  %v20 = vld [vmem:[%s0 + $0x20] sm:$0xff]
  %v21 = vld [vmem:[%s0 + $0x28] sm:$0xff]
  %v22 = vld [vmem:[%s0 + $0x30] sm:$0xff]
  %v23 = vld [vmem:[%s0 + $0x38] sm:$0xff]
  %v24 = vld [vmem:[%s0 + $0x40] sm:$0xff]
  %v25 = vld [vmem:[%s0 + $0x48] sm:$0xff]
  %v26 = vld [vmem:[%s0 + $0x50] sm:$0xff]
  %v27 = vld [vmem:[%s0 + $0x58] sm:$0xff]
  %v28 = vld [vmem:[%s0 + $0x60] sm:$0xff]
  %v29 = vld [vmem:[%s0 + $0x68] sm:$0xff]
  %v30 = vld [vmem:[%s0 + $0x70] sm:$0xff]
  %v31 = vld [vmem:[%s0 + $0x78] sm:$0xff]
  %v32 = vld [vmem:[%s0 + $0x80] sm:$0xff]
  %v33 = vld [vmem:[%s0 + $0x88] sm:$0xff]
  %v34 = vld [vmem:[%s0 + $0x90] sm:$0xff]
  %v35 = vld [vmem:[%s0 + $0x98] sm:$0xff]
  %v36 = vld [vmem:[%s2] sm:$0xff]
  %38 = vset.pattern.permute.xlu0 0
  %39 = vperm.xlu0 %38, %v36
  %v40 = vpop.permute.xlu0 %39
  %v62 = vunpack.c.l.b16 %v16
  %v63 = vunpack.c.h.b16 %v16
  %v64 = vunpack.c.l.b16 %v17
  %v65 = vunpack.c.h.b16 %v17
  %v66 = vunpack.c.l.b16 %v18
  %v67 = vunpack.c.h.b16 %v18
  %v68 = vunpack.c.l.b16 %v19
  %v69 = vunpack.c.h.b16 %v19
  %v70 = vunpack.c.l.b16 %v20
  %v71 = vunpack.c.h.b16 %v20
  %v72 = vunpack.c.l.b16 %v21
  %v73 = vunpack.c.h.b16 %v21
  %v74 = vunpack.c.l.b16 %v22
  %v75 = vunpack.c.h.b16 %v22
  %v76 = vunpack.c.l.b16 %v23
  %v77 = vunpack.c.h.b16 %v23
  %v78 = vunpack.c.l.b16 %v24
  %v79 = vunpack.c.h.b16 %v24
  %v80 = vunpack.c.l.b16 %v25
  %v81 = vunpack.c.h.b16 %v25
  %v82 = vunpack.c.l.b16 %v26
  %v83 = vunpack.c.h.b16 %v26
  %v84 = vunpack.c.l.b16 %v27
  %v85 = vunpack.c.h.b16 %v27
  %v86 = vunpack.c.l.b16 %v28
  %v87 = vunpack.c.h.b16 %v28
  %v88 = vunpack.c.l.b16 %v29
  %v89 = vunpack.c.h.b16 %v29
  %v90 = vunpack.c.l.b16 %v30
  %v91 = vunpack.c.h.b16 %v30
  %v92 = vunpack.c.l.b16 %v31
  %v93 = vunpack.c.h.b16 %v31
  %v94 = vunpack.c.l.b16 %v32
  %v95 = vunpack.c.h.b16 %v32
  %v96 = vunpack.c.l.b16 %v33
  %v97 = vunpack.c.h.b16 %v33
  %v98 = vunpack.c.l.b16 %v34
  %v99 = vunpack.c.h.b16 %v34
  %v100 = vunpack.c.l.b16 %v35
  %v101 = vunpack.c.h.b16 %v35
  %v102 = vpack.c.b16 %v66, %v62
  %v103 = vpack.c.b16 %v67, %v63
  %v104 = vpack.c.b16 %v68, %v64
  %v105 = vpack.c.b16 %v69, %v65
  %v106 = vpack.c.b16 %v74, %v70
  %v107 = vpack.c.b16 %v75, %v71
  %v108 = vpack.c.b16 %v76, %v72
  %v109 = vpack.c.b16 %v77, %v73
  %v110 = vpack.c.b16 %v82, %v78
  %v111 = vpack.c.b16 %v83, %v79
  %v112 = vpack.c.b16 %v84, %v80
  %v113 = vpack.c.b16 %v85, %v81
  %v114 = vpack.c.b16 %v90, %v86
  %v115 = vpack.c.b16 %v91, %v87
  %v116 = vpack.c.b16 %v92, %v88
  %v117 = vpack.c.b16 %v93, %v89
  %v118 = vpack.c.b16 %v98, %v94
  %v119 = vpack.c.b16 %v99, %v95
  %v120 = vpack.c.b16 %v100, %v96
  %v121 = vpack.c.b16 %v101, %v97
  %vm142 = vcmask 654336
  %v144 = vsel %vm142, %v15, 0
  %146 = vmatprep.subr.bf16.mxu0 %v103
  %147 = vmatpush1.bf16.msra.mxu0 %v102
  %148 = vmatprep.subr.bf16.mxu0 %v107
  %149 = vmatpush1.bf16.msra.mxu0 %v106
  %150 = vmatprep.subr.bf16.mxu0 %v111
  %151 = vmatpush1.bf16.msra.mxu0 %v110
  %152 = vmatprep.subr.bf16.mxu0 %v115
  %153 = vmatpush1.bf16.msra.mxu0 %v114
  %154 = vmatprep.subr.bf16.mxu0 %v119
  %155 = vmatpush1.bf16.msra.mxu0 %v118
  %156 = vmatprep.subr.bf16.mxu0 0
  %157 = vmatpush1.bf16.msra.mxu0 0
  %158 = vmatprep.subr.bf16.mxu0 0
  %159 = vmatpush1.bf16.msra.mxu0 0
  %160 = vmatprep.subr.bf16.mxu0 0
  %161 = vmatpush1.bf16.msra.mxu0 0
  %162 = vmatprep.subr.bf16.mxu0 0
  %163 = vmatpush1.bf16.msra.mxu0 0
  %164 = vmatprep.subr.bf16.mxu0 0
  %165 = vmatpush1.bf16.msra.mxu0 0
  %166 = vmatprep.subr.bf16.mxu0 0
  %167 = vmatpush1.bf16.msra.mxu0 0
  %168 = vmatprep.subr.bf16.mxu0 0
  %169 = vmatpush1.bf16.msra.mxu0 0
  %170 = vmatprep.subr.bf16.mxu0 0
  %171 = vmatpush1.bf16.msra.mxu0 0
  %172 = vmatprep.subr.bf16.mxu0 0
  %173 = vmatpush1.bf16.msra.mxu0 0
  %174 = vmatprep.subr.bf16.mxu0 0
  %175 = vmatpush1.bf16.msra.mxu0 0
  %176 = vmatprep.subr.bf16.mxu0 0
  %177 = vmatpush1.bf16.msra.mxu0 0
  %178 = vmatprep.mubr.bf16.mxu0 0
  %179 = vmatmul.mubr.bf16.gmra.mrb[0].mxu0 %v144
  %v180 = vpop.f32.mrb[0].mxu0
  %v181 = vadd.f32 %v40, %v180
  %v182 = vpop.f32.mrb[0].mxu0
  %v183 = vadd.f32 %v40, %v182
  %v184 = vpop.f32.mrb[0].mxu0
  %v185 = vpop.f32.mrb[0].mxu0
  %186 = vdwg.mxu0
  %187 = vmatprep.subr.bf16.mxu0 %v105
  %188 = vmatpush1.bf16.msra.mxu0 %v104
  %189 = vmatprep.subr.bf16.mxu0 %v109
  %190 = vmatpush1.bf16.msra.mxu0 %v108
  %191 = vmatprep.subr.bf16.mxu0 %v113
  %192 = vmatpush1.bf16.msra.mxu0 %v112
  %193 = vmatprep.subr.bf16.mxu0 %v117
  %194 = vmatpush1.bf16.msra.mxu0 %v116
  %195 = vmatprep.subr.bf16.mxu0 %v121
  %196 = vmatpush1.bf16.msra.mxu0 %v120
  %197 = vmatprep.subr.bf16.mxu0 0
  %198 = vmatpush1.bf16.msra.mxu0 0
  %199 = vmatprep.subr.bf16.mxu0 0
  %200 = vmatpush1.bf16.msra.mxu0 0
  %201 = vmatprep.subr.bf16.mxu0 0
  %202 = vmatpush1.bf16.msra.mxu0 0
  %203 = vmatprep.subr.bf16.mxu0 0
  %204 = vmatpush1.bf16.msra.mxu0 0
  %205 = vmatprep.subr.bf16.mxu0 0
  %206 = vmatpush1.bf16.msra.mxu0 0
  %207 = vmatprep.subr.bf16.mxu0 0
  %208 = vmatpush1.bf16.msra.mxu0 0
  %209 = vmatprep.subr.bf16.mxu0 0
  %210 = vmatpush1.bf16.msra.mxu0 0
  %211 = vmatprep.subr.bf16.mxu0 0
  %212 = vmatpush1.bf16.msra.mxu0 0
  %213 = vmatprep.subr.bf16.mxu0 0
  %214 = vmatpush1.bf16.msra.mxu0 0
  %215 = vmatprep.subr.bf16.mxu0 0
  %216 = vmatpush1.bf16.msra.mxu0 0
  %217 = vmatprep.subr.bf16.mxu0 0
  %218 = vmatpush1.bf16.msra.mxu0 0
  %219 = vmatprep.mubr.bf16.mxu0 0
  %220 = vmatmul.mubr.bf16.gmra.mrb[0].mxu0 %v144
  %v221 = vpop.f32.mrb[0].mxu0
  %v222 = vadd.f32 %v40, %v221
  %v223 = vpop.f32.mrb[0].mxu0
  %v224 = vadd.f32 %v40, %v223
  %v225 = vpop.f32.mrb[0].mxu0
  %v226 = vpop.f32.mrb[0].mxu0
  %227 = vdwg.mxu0
  %228 = vst [vmem:[%s3] sm:$0xff] %v181
  %229 = vst [vmem:[%s3 + $0x8] sm:$0xff] %v183
  %230 = vst [vmem:[%s3 + $0x10] sm:$0xff] %v222
  %231 = vst [vmem:[%s3 + $0x18] sm:$0xff] %v224
  // Predicated region
  $region14: #{dilate_center_forward.7} parent=0 // pred_check
    _
  $region15: #{dilate_center_forward.7} parent=0 // pred_check_branch
    %233 = sbr.rel (0) target = $region17
  $region16: #{dilate_center_forward.7} parent=0 // pred_region
    _
  $region17: #{dilate_center_forward.7} parent=0 // pred_fallthru
    _
  // Predicated region
  $region18: #{dilate_center_forward.7} parent=0 // pred_check
    _
  $region19: #{dilate_center_forward.7} parent=0 // pred_check_branch
    %235 = sbr.rel (0) target = $region21
  $region20: #{dilate_center_forward.7} parent=0 // pred_region
    _
  $region21: #{dilate_center_forward.7} parent=0 // pred_fallthru
    _

// kernel: dilate_center_forward.10
$region0: #{dilate_center_forward.10}
  #allocation0 [shape = 'u32[]', space=smem, size = 0x4, offset = 0x4, fixed_abs, tag = 'smem constant byte address 0x4 - core index']
  #allocation1 [shape = 'u32[144,128]{1,0:T(1,128)}', space=vmem, size = 0x12000, scoped, tag = 'internal scratch']
  %s0 = inlined_call_operand.vmem [shape: bf16[80,512], index: 0, kind: input, shape index: {}]
  %s1 = inlined_call_operand.vmem [shape: bf16[8,80], index: 1, kind: input, shape index: {}]
  %s2 = inlined_call_operand.vmem [shape: f32[8,1], index: 2, kind: input, shape index: {}]
  %s3 = inlined_call_operand.vmem [shape: f32[8,512], index: 3, kind: input, shape index: {}]
  %s4 = inlined_call_operand.vmem [shape: f32[8,512], index: 4, kind: input, shape index: {}]
  %s5 = inlined_call_operand.vmem [shape: f32[8,512], index: 5, kind: input, shape index: {}]
  %s6 = inlined_call_operand.vmem [shape: f32[8,512], index: 6, kind: input, shape index: {}]
  %s7 = inlined_call_operand.vmem [shape: f32[8,512], index: 7, kind: output, shape index: {}]
  %s8 = sld [smem:[#allocation0]]
  $region38: #{dilate_center_forward.10} parent=0
    _
  %s10 = ssub.s32 1, %s8
  %s11 = scalar_select 0, %s10, %s8
  // Predicated region
  $region2: #{dilate_center_forward.10} parent=0 // pred_check
    _
  $region3: #{dilate_center_forward.10} parent=0 // pred_check_branch
    %13 = sbr.rel (0) target = $region5
  $region4: #{dilate_center_forward.10} parent=0 // pred_region
    _
  $region5: #{dilate_center_forward.10} parent=0 // pred_fallthru
    _
  // Predicated region
  $region6: #{dilate_center_forward.10} parent=0 // pred_check
    _
  $region7: #{dilate_center_forward.10} parent=0 // pred_check_branch
    %15 = sbr.rel (0) target = $region9
  $region8: #{dilate_center_forward.10} parent=0 // pred_region
    _
  $region9: #{dilate_center_forward.10} parent=0 // pred_fallthru
    _
  // Predicated region
  $region10: #{dilate_center_forward.10} parent=0 // pred_check
    _
  $region11: #{dilate_center_forward.10} parent=0 // pred_check_branch
    %17 = sbr.rel (0) target = $region13
  $region12: #{dilate_center_forward.10} parent=0 // pred_region
    _
  $region13: #{dilate_center_forward.10} parent=0 // pred_fallthru
    _
  // Predicated region
  $region14: #{dilate_center_forward.10} parent=0 // pred_check
    _
  $region15: #{dilate_center_forward.10} parent=0 // pred_check_branch
    %19 = sbr.rel (0) target = $region17
  $region16: #{dilate_center_forward.10} parent=0 // pred_region
    _
  $region17: #{dilate_center_forward.10} parent=0 // pred_fallthru
    _
  // Predicated region
  $region18: #{dilate_center_forward.10} parent=0 // pred_check
    _
  $region19: #{dilate_center_forward.10} parent=0 // pred_check_branch
    %21 = sbr.rel (0) target = $region21
  $region20: #{dilate_center_forward.10} parent=0 // pred_region
    _
  $region21: #{dilate_center_forward.10} parent=0 // pred_fallthru
    _
  // Predicated region
  $region22: #{dilate_center_forward.10} parent=0 // pred_check
    _
  $region23: #{dilate_center_forward.10} parent=0 // pred_check_branch
    %23 = sbr.rel (0) target = $region25
  $region24: #{dilate_center_forward.10} parent=0 // pred_region
    _
  $region25: #{dilate_center_forward.10} parent=0 // pred_fallthru
    _
  // Predicated region
  $region26: #{dilate_center_forward.10} parent=0 // pred_check
    _
  $region27: #{dilate_center_forward.10} parent=0 // pred_check_branch
    %25 = sbr.rel (0) target = $region29
  $region28: #{dilate_center_forward.10} parent=0 // pred_region
    _
  $region29: #{dilate_center_forward.10} parent=0 // pred_fallthru
    _
  %v27 = vld [vmem:[%s1] sm:$0xf]
  %v28 = vld [vmem:[%s0] sm:$0xff]
  %v29 = vld [vmem:[%s0 + $0x8] sm:$0xff]
  %v30 = vld [vmem:[%s0 + $0x10] sm:$0xff]
  %v31 = vld [vmem:[%s0 + $0x18] sm:$0xff]
  %v32 = vld [vmem:[%s0 + $0x20] sm:$0xff]
  %v33 = vld [vmem:[%s0 + $0x28] sm:$0xff]
  %v34 = vld [vmem:[%s0 + $0x30] sm:$0xff]
  %v35 = vld [vmem:[%s0 + $0x38] sm:$0xff]
  %v36 = vld [vmem:[%s0 + $0x40] sm:$0xff]
  %v37 = vld [vmem:[%s0 + $0x48] sm:$0xff]
  %v38 = vld [vmem:[%s0 + $0x50] sm:$0xff]
  %v39 = vld [vmem:[%s0 + $0x58] sm:$0xff]
  %v40 = vld [vmem:[%s0 + $0x60] sm:$0xff]
  %v41 = vld [vmem:[%s0 + $0x68] sm:$0xff]
  %v42 = vld [vmem:[%s0 + $0x70] sm:$0xff]
  %v43 = vld [vmem:[%s0 + $0x78] sm:$0xff]
  %v44 = vld [vmem:[%s0 + $0x80] sm:$0xff]
  %v45 = vld [vmem:[%s0 + $0x88] sm:$0xff]
  %v46 = vld [vmem:[%s0 + $0x90] sm:$0xff]
  %v47 = vld [vmem:[%s0 + $0x98] sm:$0xff]
  %v48 = vld [vmem:[%s2] sm:$0xff]
  %50 = vset.pattern.permute.xlu0 0
  %51 = vperm.xlu0 %50, %v48
  %v52 = vpop.permute.xlu0 %51
  %v74 = vunpack.c.l.b16 %v28
  %v75 = vunpack.c.h.b16 %v28
  %v76 = vunpack.c.l.b16 %v29
  %v77 = vunpack.c.h.b16 %v29
  %v78 = vunpack.c.l.b16 %v30
  %v79 = vunpack.c.h.b16 %v30
  %v80 = vunpack.c.l.b16 %v31
  %v81 = vunpack.c.h.b16 %v31
  %v82 = vunpack.c.l.b16 %v32
  %v83 = vunpack.c.h.b16 %v32
  %v84 = vunpack.c.l.b16 %v33
  %v85 = vunpack.c.h.b16 %v33
  %v86 = vunpack.c.l.b16 %v34
  %v87 = vunpack.c.h.b16 %v34
  %v88 = vunpack.c.l.b16 %v35
  %v89 = vunpack.c.h.b16 %v35
  %v90 = vunpack.c.l.b16 %v36
  %v91 = vunpack.c.h.b16 %v36
  %v92 = vunpack.c.l.b16 %v37
  %v93 = vunpack.c.h.b16 %v37
  %v94 = vunpack.c.l.b16 %v38
  %v95 = vunpack.c.h.b16 %v38
  %v96 = vunpack.c.l.b16 %v39
  %v97 = vunpack.c.h.b16 %v39
  %v98 = vunpack.c.l.b16 %v40
  %v99 = vunpack.c.h.b16 %v40
  %v100 = vunpack.c.l.b16 %v41
  %v101 = vunpack.c.h.b16 %v41
  %v102 = vunpack.c.l.b16 %v42
  %v103 = vunpack.c.h.b16 %v42
  %v104 = vunpack.c.l.b16 %v43
  %v105 = vunpack.c.h.b16 %v43
  %v106 = vunpack.c.l.b16 %v44
  %v107 = vunpack.c.h.b16 %v44
  %v108 = vunpack.c.l.b16 %v45
  %v109 = vunpack.c.h.b16 %v45
  %v110 = vunpack.c.l.b16 %v46
  %v111 = vunpack.c.h.b16 %v46
  %v112 = vunpack.c.l.b16 %v47
  %v113 = vunpack.c.h.b16 %v47
  %v114 = vpack.c.b16 %v78, %v74
  %v115 = vpack.c.b16 %v79, %v75
  %v116 = vpack.c.b16 %v80, %v76
  %v117 = vpack.c.b16 %v81, %v77
  %v118 = vpack.c.b16 %v86, %v82
  %v119 = vpack.c.b16 %v87, %v83
  %v120 = vpack.c.b16 %v88, %v84
  %v121 = vpack.c.b16 %v89, %v85
  %v122 = vpack.c.b16 %v94, %v90
  %v123 = vpack.c.b16 %v95, %v91
  %v124 = vpack.c.b16 %v96, %v92
  %v125 = vpack.c.b16 %v97, %v93
  %v126 = vpack.c.b16 %v102, %v98
  %v127 = vpack.c.b16 %v103, %v99
  %v128 = vpack.c.b16 %v104, %v100
  %v129 = vpack.c.b16 %v105, %v101
  %v130 = vpack.c.b16 %v110, %v106
  %v131 = vpack.c.b16 %v111, %v107
  %v132 = vpack.c.b16 %v112, %v108
  %v133 = vpack.c.b16 %v113, %v109
  %vm154 = vcmask 654336
  %v156 = vsel %vm154, %v27, 0
  %158 = vmatprep.subr.bf16.mxu0 %v115
  %159 = vmatpush1.bf16.msra.mxu0 %v114
  %160 = vmatprep.subr.bf16.mxu0 %v119
  %161 = vmatpush1.bf16.msra.mxu0 %v118
  %162 = vmatprep.subr.bf16.mxu0 %v123
  %163 = vmatpush1.bf16.msra.mxu0 %v122
  %164 = vmatprep.subr.bf16.mxu0 %v127
  %165 = vmatpush1.bf16.msra.mxu0 %v126
  %166 = vmatprep.subr.bf16.mxu0 %v131
  %167 = vmatpush1.bf16.msra.mxu0 %v130
  %168 = vmatprep.subr.bf16.mxu0 0
  %169 = vmatpush1.bf16.msra.mxu0 0
  %170 = vmatprep.subr.bf16.mxu0 0
  %171 = vmatpush1.bf16.msra.mxu0 0
  %172 = vmatprep.subr.bf16.mxu0 0
  %173 = vmatpush1.bf16.msra.mxu0 0
  %174 = vmatprep.subr.bf16.mxu0 0
  %175 = vmatpush1.bf16.msra.mxu0 0
  %176 = vmatprep.subr.bf16.mxu0 0
  %177 = vmatpush1.bf16.msra.mxu0 0
  %178 = vmatprep.subr.bf16.mxu0 0
  %179 = vmatpush1.bf16.msra.mxu0 0
  %180 = vmatprep.subr.bf16.mxu0 0
  %181 = vmatpush1.bf16.msra.mxu0 0
  %182 = vmatprep.subr.bf16.mxu0 0
  %183 = vmatpush1.bf16.msra.mxu0 0
  %184 = vmatprep.subr.bf16.mxu0 0
  %185 = vmatpush1.bf16.msra.mxu0 0
  %186 = vmatprep.subr.bf16.mxu0 0
  %187 = vmatpush1.bf16.msra.mxu0 0
  %188 = vmatprep.subr.bf16.mxu0 0
  %189 = vmatpush1.bf16.msra.mxu0 0
  %190 = vmatprep.mubr.bf16.mxu0 0
  %191 = vmatmul.mubr.bf16.gmra.mrb[0].mxu0 %v156
  %v192 = vpop.f32.mrb[0].mxu0
  %v193 = vadd.f32 %v52, %v192
  %v194 = vpop.f32.mrb[0].mxu0
  %v195 = vadd.f32 %v52, %v194
  %v196 = vpop.f32.mrb[0].mxu0
  %v197 = vpop.f32.mrb[0].mxu0
  %198 = vdwg.mxu0
  %199 = vmatprep.subr.bf16.mxu0 %v117
  %200 = vmatpush1.bf16.msra.mxu0 %v116
  %201 = vmatprep.subr.bf16.mxu0 %v121
  %202 = vmatpush1.bf16.msra.mxu0 %v120
  %203 = vmatprep.subr.bf16.mxu0 %v125
  %204 = vmatpush1.bf16.msra.mxu0 %v124
  %205 = vmatprep.subr.bf16.mxu0 %v129
  %206 = vmatpush1.bf16.msra.mxu0 %v128
  %207 = vmatprep.subr.bf16.mxu0 %v133
  %208 = vmatpush1.bf16.msra.mxu0 %v132
  %209 = vmatprep.subr.bf16.mxu0 0
  %210 = vmatpush1.bf16.msra.mxu0 0
  %211 = vmatprep.subr.bf16.mxu0 0
  %212 = vmatpush1.bf16.msra.mxu0 0
  %213 = vmatprep.subr.bf16.mxu0 0
  %214 = vmatpush1.bf16.msra.mxu0 0
  %215 = vmatprep.subr.bf16.mxu0 0
  %216 = vmatpush1.bf16.msra.mxu0 0
  %217 = vmatprep.subr.bf16.mxu0 0
  %218 = vmatpush1.bf16.msra.mxu0 0
  %219 = vmatprep.subr.bf16.mxu0 0
  %220 = vmatpush1.bf16.msra.mxu0 0
  %221 = vmatprep.subr.bf16.mxu0 0
  %222 = vmatpush1.bf16.msra.mxu0 0
  %223 = vmatprep.subr.bf16.mxu0 0
  %224 = vmatpush1.bf16.msra.mxu0 0
  %225 = vmatprep.subr.bf16.mxu0 0
  %226 = vmatpush1.bf16.msra.mxu0 0
  %227 = vmatprep.subr.bf16.mxu0 0
  %228 = vmatpush1.bf16.msra.mxu0 0
  %229 = vmatprep.subr.bf16.mxu0 0
  %230 = vmatpush1.bf16.msra.mxu0 0
  %231 = vmatprep.mubr.bf16.mxu0 0
  %232 = vmatmul.mubr.bf16.gmra.mrb[0].mxu0 %v156
  %v233 = vpop.f32.mrb[0].mxu0
  %v234 = vadd.f32 %v52, %v233
  %v235 = vpop.f32.mrb[0].mxu0
  %v236 = vadd.f32 %v52, %v235
  %v237 = vpop.f32.mrb[0].mxu0
  %v238 = vpop.f32.mrb[0].mxu0
  %239 = vdwg.mxu0
  %v240 = vld [vmem:[%s3] sm:$0xff]
  %v241 = vld [vmem:[%s3 + $0x8] sm:$0xff]
  %v242 = vld [vmem:[%s3 + $0x10] sm:$0xff]
  %v243 = vld [vmem:[%s3 + $0x18] sm:$0xff]
  %v244 = vadd.f32 %v193, %v240
  %v245 = vadd.f32 %v195, %v241
  %v246 = vadd.f32 %v234, %v242
  %v247 = vadd.f32 %v236, %v243
  %v248 = vld [vmem:[%s4] sm:$0xff]
  %v249 = vld [vmem:[%s4 + $0x8] sm:$0xff]
  %v250 = vld [vmem:[%s4 + $0x10] sm:$0xff]
  %v251 = vld [vmem:[%s4 + $0x18] sm:$0xff]
  %v252 = vadd.f32 %v244, %v248
  %v253 = vadd.f32 %v245, %v249
  %v254 = vadd.f32 %v246, %v250
  %v255 = vadd.f32 %v247, %v251
  %v256 = vld [vmem:[%s5] sm:$0xff]
  %v257 = vld [vmem:[%s5 + $0x8] sm:$0xff]
  %v258 = vld [vmem:[%s5 + $0x10] sm:$0xff]
  %v259 = vld [vmem:[%s5 + $0x18] sm:$0xff]
  %v260 = vadd.f32 %v252, %v256
  %v261 = vadd.f32 %v253, %v257
  %v262 = vadd.f32 %v254, %v258
  %v263 = vadd.f32 %v255, %v259
  %v264 = vld [vmem:[%s6] sm:$0xff]
  %v265 = vld [vmem:[%s6 + $0x8] sm:$0xff]
  %v266 = vld [vmem:[%s6 + $0x10] sm:$0xff]
  %v267 = vld [vmem:[%s6 + $0x18] sm:$0xff]
  %v268 = vadd.f32 %v260, %v264
  %v269 = vadd.f32 %v261, %v265
  %v270 = vadd.f32 %v262, %v266
  %v271 = vadd.f32 %v263, %v267
  %v272 = vmax.f32 %v268, 0.0
  %v273 = vmax.f32 %v269, 0.0
  %v274 = vmax.f32 %v270, 0.0
  %v275 = vmax.f32 %v271, 0.0
  %276 = vst [vmem:[%s7] sm:$0xff] %v272
  %277 = vst [vmem:[%s7 + $0x8] sm:$0xff] %v273
  %278 = vst [vmem:[%s7 + $0x10] sm:$0xff] %v274
  %279 = vst [vmem:[%s7 + $0x18] sm:$0xff] %v275
  // Predicated region
  $region30: #{dilate_center_forward.10} parent=0 // pred_check
    _
  $region31: #{dilate_center_forward.10} parent=0 // pred_check_branch
    %281 = sbr.rel (0) target = $region33
  $region32: #{dilate_center_forward.10} parent=0 // pred_region
    _
  $region33: #{dilate_center_forward.10} parent=0 // pred_fallthru
    _
  // Predicated region
  $region34: #{dilate_center_forward.10} parent=0 // pred_check
    _
  $region35: #{dilate_center_forward.10} parent=0 // pred_check_branch
    %283 = sbr.rel (0) target = $region37
  $region36: #{dilate_center_forward.10} parent=0 // pred_region
    _
  $region37: #{dilate_center_forward.10} parent=0 // pred_fallthru
    _

// kernel: dilate_center_forward.11
$region0: #{dilate_center_forward.11}
  #allocation0 [shape = 'u32[]', space=smem, size = 0x4, offset = 0x4, fixed_abs, tag = 'smem constant byte address 0x4 - core index']
  #allocation1 [shape = 'u32[144,128]{1,0:T(1,128)}', space=vmem, size = 0x12000, scoped, tag = 'internal scratch']
  %s0 = inlined_call_operand.vmem [shape: bf16[80,384], index: 0, kind: input, shape index: {}]
  %s1 = inlined_call_operand.vmem [shape: bf16[8,80], index: 1, kind: input, shape index: {}]
  %s2 = inlined_call_operand.vmem [shape: f32[8,1], index: 2, kind: input, shape index: {}]
  %s3 = inlined_call_operand.vmem [shape: f32[8,384], index: 3, kind: output, shape index: {}]
  %s4 = sld [smem:[#allocation0]]
  $region22: #{dilate_center_forward.11} parent=0
    _
  %s6 = ssub.s32 1, %s4
  %s7 = scalar_select 0, %s6, %s4
  // Predicated region
  $region2: #{dilate_center_forward.11} parent=0 // pred_check
    _
  $region3: #{dilate_center_forward.11} parent=0 // pred_check_branch
    %9 = sbr.rel (0) target = $region5
  $region4: #{dilate_center_forward.11} parent=0 // pred_region
    _
  $region5: #{dilate_center_forward.11} parent=0 // pred_fallthru
    _
  // Predicated region
  $region6: #{dilate_center_forward.11} parent=0 // pred_check
    _
  $region7: #{dilate_center_forward.11} parent=0 // pred_check_branch
    %11 = sbr.rel (0) target = $region9
  $region8: #{dilate_center_forward.11} parent=0 // pred_region
    _
  $region9: #{dilate_center_forward.11} parent=0 // pred_fallthru
    _
  // Predicated region
  $region10: #{dilate_center_forward.11} parent=0 // pred_check
    _
  $region11: #{dilate_center_forward.11} parent=0 // pred_check_branch
    %13 = sbr.rel (0) target = $region13
  $region12: #{dilate_center_forward.11} parent=0 // pred_region
    _
  $region13: #{dilate_center_forward.11} parent=0 // pred_fallthru
    _
  %v15 = vld [vmem:[%s1] sm:$0xf]
  %v16 = vld [vmem:[%s0] sm:$0xff]
  %v17 = vld [vmem:[%s0 + $0x8] sm:$0xf]
  %v18 = vld [vmem:[%s0 + $0xc] sm:$0xff]
  %v19 = vld [vmem:[%s0 + $0x14] sm:$0xf]
  %v20 = vld [vmem:[%s0 + $0x18] sm:$0xff]
  %v21 = vld [vmem:[%s0 + $0x20] sm:$0xf]
  %v22 = vld [vmem:[%s0 + $0x24] sm:$0xff]
  %v23 = vld [vmem:[%s0 + $0x2c] sm:$0xf]
  %v24 = vld [vmem:[%s0 + $0x30] sm:$0xff]
  %v25 = vld [vmem:[%s0 + $0x38] sm:$0xf]
  %v26 = vld [vmem:[%s0 + $0x3c] sm:$0xff]
  %v27 = vld [vmem:[%s0 + $0x44] sm:$0xf]
  %v28 = vld [vmem:[%s0 + $0x48] sm:$0xff]
  %v29 = vld [vmem:[%s0 + $0x50] sm:$0xf]
  %v30 = vld [vmem:[%s0 + $0x54] sm:$0xff]
  %v31 = vld [vmem:[%s0 + $0x5c] sm:$0xf]
  %v32 = vld [vmem:[%s0 + $0x60] sm:$0xff]
  %v33 = vld [vmem:[%s0 + $0x68] sm:$0xf]
  %v34 = vld [vmem:[%s0 + $0x6c] sm:$0xff]
  %v35 = vld [vmem:[%s0 + $0x74] sm:$0xf]
  %v36 = vld [vmem:[%s2] sm:$0xff]
  %38 = vset.pattern.permute.xlu0 0
  %39 = vperm.xlu0 %38, %v36
  %v40 = vpop.permute.xlu0 %39
  %v62 = vunpack.c.l.b16 %v16
  %v63 = vunpack.c.h.b16 %v16
  %v64 = vunpack.c.l.b16 %v17
  %v65 = vunpack.c.l.b16 %v18
  %v66 = vunpack.c.h.b16 %v18
  %v67 = vunpack.c.l.b16 %v19
  %v68 = vunpack.c.l.b16 %v20
  %v69 = vunpack.c.h.b16 %v20
  %v70 = vunpack.c.l.b16 %v21
  %v71 = vunpack.c.l.b16 %v22
  %v72 = vunpack.c.h.b16 %v22
  %v73 = vunpack.c.l.b16 %v23
  %v74 = vunpack.c.l.b16 %v24
  %v75 = vunpack.c.h.b16 %v24
  %v76 = vunpack.c.l.b16 %v25
  %v77 = vunpack.c.l.b16 %v26
  %v78 = vunpack.c.h.b16 %v26
  %v79 = vunpack.c.l.b16 %v27
  %v80 = vunpack.c.l.b16 %v28
  %v81 = vunpack.c.h.b16 %v28
  %v82 = vunpack.c.l.b16 %v29
  %v83 = vunpack.c.l.b16 %v30
  %v84 = vunpack.c.h.b16 %v30
  %v85 = vunpack.c.l.b16 %v31
  %v86 = vunpack.c.l.b16 %v32
  %v87 = vunpack.c.h.b16 %v32
  %v88 = vunpack.c.l.b16 %v33
  %v89 = vunpack.c.l.b16 %v34
  %v90 = vunpack.c.h.b16 %v34
  %v91 = vunpack.c.l.b16 %v35
  %v92 = vpack.c.b16 %v65, %v62
  %v93 = vpack.c.b16 %v66, %v63
  %v94 = vpack.c.b16 %v67, %v64
  %v95 = vpack.c.b16 %v71, %v68
  %v96 = vpack.c.b16 %v72, %v69
  %v97 = vpack.c.b16 %v73, %v70
  %v98 = vpack.c.b16 %v77, %v74
  %v99 = vpack.c.b16 %v78, %v75
  %v100 = vpack.c.b16 %v79, %v76
  %v101 = vpack.c.b16 %v83, %v80
  %v102 = vpack.c.b16 %v84, %v81
  %v103 = vpack.c.b16 %v85, %v82
  %v104 = vpack.c.b16 %v89, %v86
  %v105 = vpack.c.b16 %v90, %v87
  %v106 = vpack.c.b16 %v91, %v88
  %vm122 = vcmask 654336
  %v124 = vsel %vm122, %v15, 0
  %126 = vmatprep.subr.bf16.mxu0 %v93
  %127 = vmatpush1.bf16.msra.mxu0 %v92
  %128 = vmatprep.subr.bf16.mxu0 %v96
  %129 = vmatpush1.bf16.msra.mxu0 %v95
  %130 = vmatprep.subr.bf16.mxu0 %v99
  %131 = vmatpush1.bf16.msra.mxu0 %v98
  %132 = vmatprep.subr.bf16.mxu0 %v102
  %133 = vmatpush1.bf16.msra.mxu0 %v101
  %134 = vmatprep.subr.bf16.mxu0 %v105
  %135 = vmatpush1.bf16.msra.mxu0 %v104
  %136 = vmatprep.subr.bf16.mxu0 0
  %137 = vmatpush1.bf16.msra.mxu0 0
  %138 = vmatprep.subr.bf16.mxu0 0
  %139 = vmatpush1.bf16.msra.mxu0 0
  %140 = vmatprep.subr.bf16.mxu0 0
  %141 = vmatpush1.bf16.msra.mxu0 0
  %142 = vmatprep.subr.bf16.mxu0 0
  %143 = vmatpush1.bf16.msra.mxu0 0
  %144 = vmatprep.subr.bf16.mxu0 0
  %145 = vmatpush1.bf16.msra.mxu0 0
  %146 = vmatprep.subr.bf16.mxu0 0
  %147 = vmatpush1.bf16.msra.mxu0 0
  %148 = vmatprep.subr.bf16.mxu0 0
  %149 = vmatpush1.bf16.msra.mxu0 0
  %150 = vmatprep.subr.bf16.mxu0 0
  %151 = vmatpush1.bf16.msra.mxu0 0
  %152 = vmatprep.subr.bf16.mxu0 0
  %153 = vmatpush1.bf16.msra.mxu0 0
  %154 = vmatprep.subr.bf16.mxu0 0
  %155 = vmatpush1.bf16.msra.mxu0 0
  %156 = vmatprep.subr.bf16.mxu0 0
  %157 = vmatpush1.bf16.msra.mxu0 0
  %158 = vmatprep.mubr.bf16.mxu0 0
  %159 = vmatmul.mubr.bf16.gmra.mrb[0].mxu0 %v124
  %v160 = vpop.f32.mrb[0].mxu0
  %v161 = vadd.f32 %v40, %v160
  %v162 = vpop.f32.mrb[0].mxu0
  %v163 = vadd.f32 %v40, %v162
  %v164 = vpop.f32.mrb[0].mxu0
  %v165 = vpop.f32.mrb[0].mxu0
  %166 = vdwg.mxu0
  %167 = vmatprep.subr.bf16.mxu0 0
  %168 = vmatpush1.bf16.msra.mxu0 %v94
  %169 = vmatprep.subr.bf16.mxu0 0
  %170 = vmatpush1.bf16.msra.mxu0 %v97
  %171 = vmatprep.subr.bf16.mxu0 0
  %172 = vmatpush1.bf16.msra.mxu0 %v100
  %173 = vmatprep.subr.bf16.mxu0 0
  %174 = vmatpush1.bf16.msra.mxu0 %v103
  %175 = vmatprep.subr.bf16.mxu0 0
  %176 = vmatpush1.bf16.msra.mxu0 %v106
  %177 = vmatprep.subr.bf16.mxu0 0
  %178 = vmatpush1.bf16.msra.mxu0 0
  %179 = vmatprep.subr.bf16.mxu0 0
  %180 = vmatpush1.bf16.msra.mxu0 0
  %181 = vmatprep.subr.bf16.mxu0 0
  %182 = vmatpush1.bf16.msra.mxu0 0
  %183 = vmatprep.subr.bf16.mxu0 0
  %184 = vmatpush1.bf16.msra.mxu0 0
  %185 = vmatprep.subr.bf16.mxu0 0
  %186 = vmatpush1.bf16.msra.mxu0 0
  %187 = vmatprep.subr.bf16.mxu0 0
  %188 = vmatpush1.bf16.msra.mxu0 0
  %189 = vmatprep.subr.bf16.mxu0 0
  %190 = vmatpush1.bf16.msra.mxu0 0
  %191 = vmatprep.subr.bf16.mxu0 0
  %192 = vmatpush1.bf16.msra.mxu0 0
  %193 = vmatprep.subr.bf16.mxu0 0
  %194 = vmatpush1.bf16.msra.mxu0 0
  %195 = vmatprep.subr.bf16.mxu0 0
  %196 = vmatpush1.bf16.msra.mxu0 0
  %197 = vmatprep.subr.bf16.mxu0 0
  %198 = vmatpush1.bf16.msra.mxu0 0
  %199 = vmatprep.mubr.bf16.mxu0 0
  %200 = vmatmul.mubr.bf16.gmra.mrb[0].mxu0 %v124
  %v201 = vpop.f32.mrb[0].mxu0
  %v202 = vadd.f32 %v40, %v201
  %v203 = vpop.f32.mrb[0].mxu0
  %v204 = vpop.f32.mrb[0].mxu0
  %v205 = vpop.f32.mrb[0].mxu0
  %206 = vdwg.mxu0
  %v207 = vmax.f32 %v161, 0.0
  %v208 = vmax.f32 %v163, 0.0
  %v209 = vmax.f32 %v202, 0.0
  %210 = vst [vmem:[%s3] sm:$0xff] %v207
  %211 = vst [vmem:[%s3 + $0x8] sm:$0xff] %v208
  %212 = vst [vmem:[%s3 + $0x10] sm:$0xff] %v209
  // Predicated region
  $region14: #{dilate_center_forward.11} parent=0 // pred_check
    _
  $region15: #{dilate_center_forward.11} parent=0 // pred_check_branch
    %214 = sbr.rel (0) target = $region17
  $region16: #{dilate_center_forward.11} parent=0 // pred_region
    _
  $region17: #{dilate_center_forward.11} parent=0 // pred_fallthru
    _
  // Predicated region
  $region18: #{dilate_center_forward.11} parent=0 // pred_check
    _
  $region19: #{dilate_center_forward.11} parent=0 // pred_check_branch
    %216 = sbr.rel (0) target = $region21
  $region20: #{dilate_center_forward.11} parent=0 // pred_region
    _
  $region21: #{dilate_center_forward.11} parent=0 // pred_fallthru
    _

</llo_original>
